<compile_context>
chip_gen: v7x
topology: tpu7x:2x2x1
jax: 0.10.0
libtpu: 0.0.40
codegen_flags: <defaults>
</compile_context>

<pallas_src>
import functools

import jax
import jax.numpy as jnp
from jax.experimental import pallas as pl
from jax.experimental.pallas import tpu as pltpu

LANES = 128
SUBLANES = 8
ACC_GROUPS = 4                     # independent accumulator vregs (break VALU dep chain)
ACC_ROWS = ACC_GROUPS * SUBLANES   # 32
TILE_ROWS_MAX = 8192               # (8192,128) f32 = 4 MiB/block; 8 MiB double-buffered
NUM_SPLITS = 2                     # leading "parallel" grid axis -> 2 TCs on v7x


def _round_up(x, m):
    return ((x + m - 1) // m) * m


def _log_sum_kernel(x_ref, o_ref, acc_ref, *, rows, tile_rows, blocks_per_split,
                    full_cover):
    c = pl.program_id(0)           # core-split index
    i = pl.program_id(1)           # block index within this split
    start_row = (c * blocks_per_split + i) * tile_rows

    @pl.when(i == 0)
    def _():
        acc_ref[...] = jnp.zeros_like(acc_ref)

    def accumulate(xv):
        logx = jnp.log(xv)  # EUP transcendental, hidden under the DMA
        # Lane/sublane-wise partial sums into ACC_GROUPS independent vreg groups:
        # pure VPU adds, no per-step XLU or SMEM round-trip, shorter dep chain.
        acc_ref[...] += jnp.sum(logx.reshape(-1, ACC_ROWS, LANES), axis=0)

    if full_cover:
        # Grid exactly tiles the slab: no masking work anywhere.
        accumulate(x_ref[...].astype(jnp.float32))
    else:
        # Fast path: block lies fully inside the slab -> no mask.
        @pl.when(start_row + tile_rows <= rows)
        def _():
            accumulate(x_ref[...].astype(jnp.float32))

        # Slow path: only the single partially-valid edge block pays the mask
        # (OOB rows -> 1.0, log(1) = 0).
        @pl.when(jnp.logical_and(start_row < rows, start_row + tile_rows > rows))
        def _():
            row_ids = start_row + jax.lax.broadcasted_iota(
                jnp.int32, (tile_rows, LANES), 0)
            xv = jnp.where(row_ids < rows, x_ref[...].astype(jnp.float32), 1.0)
            accumulate(xv)
        # A block entirely past the end of the slab (phantom block when the block
        # count is odd and split across cores) contributes nothing.

    @pl.when(i == pl.num_programs(1) - 1)
    def _():
        # Single cross-lane + cross-sublane reduction per core, in the epilogue.
        o_ref[0, 0] = jnp.sum(acc_ref[...])


def log_loss(x: jax.Array, negation: bool = True) -> jax.Array:
    """Equivalent of Log_loss.forward(x, negation): (-)sum(log(x))."""
    flat = x.reshape(-1)           # native dtype; cast to f32 happens in-vreg
    n = flat.shape[0]
    rows = n // LANES
    n_main = rows * LANES

    total = jnp.float32(0.0)

    if n_main:
        # NOTE: when n % 128 != 0 this prefix slice materializes an HBM copy; the
        # zero-copy fast path requires n % 128 == 0 (reshape is then a free bitcast).
        main = flat if n_main == n else flat[:n_main]
        slab = main.reshape(rows, LANES)

        tile_rows = min(TILE_ROWS_MAX, _round_up(rows, ACC_ROWS))
        num_blocks = pl.cdiv(rows, tile_rows)
        num_splits = NUM_SPLITS if num_blocks >= NUM_SPLITS else 1
        blocks_per_split = pl.cdiv(num_blocks, num_splits)
        full_cover = (num_splits * blocks_per_split == num_blocks
                      and rows % tile_rows == 0)

        def x_index_map(c, i):
            # Clamp so a phantom trailing block re-fetches the last real block
            # instead of DMA'ing out of bounds; its compute is skipped in-kernel.
            return (jnp.minimum(c * blocks_per_split + i, num_blocks - 1), 0)

        out = pl.pallas_call(
            functools.partial(
                _log_sum_kernel, rows=rows, tile_rows=tile_rows,
                blocks_per_split=blocks_per_split, full_cover=full_cover),
            out_shape=jax.ShapeDtypeStruct((num_splits, 1), jnp.float32),
            grid_spec=pltpu.PrefetchScalarGridSpec(
                num_scalar_prefetch=0,
                grid=(num_splits, blocks_per_split),
                in_specs=[pl.BlockSpec((tile_rows, LANES), x_index_map)],
                out_specs=pl.BlockSpec((1, 1), lambda c, i: (c, 0),
                                       memory_space=pltpu.SMEM),
                scratch_shapes=[pltpu.VMEM((ACC_ROWS, LANES), jnp.float32)],
            ),
            compiler_params=pltpu.CompilerParams(
                dimension_semantics=("parallel", "arbitrary"),
                vmem_limit_bytes=32 * 1024 * 1024,
            ),
            cost_estimate=pl.CostEstimate(
                flops=n_main,
                transcendentals=n_main,
                bytes_accessed=n_main * flat.dtype.itemsize + num_splits * 4,
            ),
        )(slab)
        total = total + jnp.sum(out)

    if n_main != n:
        # < 128 leftover elements: negligible, handled with plain JAX in the wrapper.
        total = total + jnp.sum(jnp.log(flat[n_main:].astype(jnp.float32)))

    return -total if negation else total


if __name__ == "__main__":
    key = jax.random.PRNGKey(0)
    # Strictly positive inputs (log domain), small NCHW shape.
    x = jax.random.uniform(
        key, (2, 4, 16, 16), dtype=jnp.float32, minval=0.1, maxval=2.0
    )

    loss_neg = jax.block_until_ready(log_loss(x, negation=True))
    loss_pos = jax.block_until_ready(log_loss(x, negation=False))

    # Reference check against plain JAX.
    ref_neg = -jnp.sum(jnp.log(x))
    ref_pos = jnp.sum(jnp.log(x))
    assert jnp.allclose(loss_neg, ref_neg, rtol=1e-5, atol=1e-5)
    assert jnp.allclose(loss_pos, ref_pos, rtol=1e-5, atol=1e-5)

    print("KERNEL_OK")
</pallas_src>

<mosaic_0001>
module attributes {stable_mosaic.version = 11 : i64} {
  func.func @_log_sum_kernel(%arg0: i32, %arg1: i32, %arg2: memref<32x128xf32, #tpu.memory_space<vmem>>, %arg3: memref<1x1xf32, #tpu.memory_space<smem>>, %arg4: memref<32x128xf32, #tpu.memory_space<vmem>>) attributes {dimension_semantics = [#tpu.dimension_semantics<parallel>, #tpu.dimension_semantics<arbitrary>], iteration_bounds = array<i64: 1, 1>, scalar_prefetch = 0 : i64, scratch_operands = 1 : i64, tpu.core_type = #tpu.core_type<tc>, window_params = [{transform_indices = @transform_0, window_bounds = array<i64: 32, 128>}, {transform_indices = @transform_1, window_bounds = array<i64: 1, 1>}]} {
    %c1_i32 = arith.constant 1 : i32
    %0 = arith.muli %arg0, %c1_i32 : i32
    %1 = arith.addi %0, %arg1 : i32
    %c32_i32 = arith.constant 32 : i32
    %2 = arith.muli %1, %c32_i32 : i32
    %c0_i32 = arith.constant 0 : i32
    %3 = arith.cmpi eq, %arg1, %c0_i32 : i32
    %4 = arith.extui %3 : i1 to i32
    %c0_i32_0 = arith.constant 0 : i32
    %5 = arith.cmpi ne, %4, %c0_i32_0 : i32
    scf.if %5 {
      %cst = arith.constant 0.000000e+00 : f32
      %19 = vector.broadcast %cst : f32 to vector<32x128xf32>
      %c0 = arith.constant 0 : index
      %c0_9 = arith.constant 0 : index
      %20 = vector.load %arg4[%c0, %c0_9] : memref<32x128xf32, #tpu.memory_space<vmem>>, vector<32x128xf32>
      tpu.vector_store %arg4[%c0, %c0_9], %19 {strides = array<i32>} : memref<32x128xf32, #tpu.memory_space<vmem>>, vector<32x128xf32>,
    } else {
    }
    %c32_i32_1 = arith.constant 32 : i32
    %6 = arith.addi %2, %c32_i32_1 : i32
    %c16_i32 = arith.constant 16 : i32
    %7 = arith.cmpi sle, %6, %c16_i32 : i32
    %8 = arith.extui %7 : i1 to i32
    %c0_i32_2 = arith.constant 0 : i32
    %9 = arith.cmpi ne, %8, %c0_i32_2 : i32
    scf.if %9 {
      %c0 = arith.constant 0 : index
      %c0_9 = arith.constant 0 : index
      %19 = vector.load %arg2[%c0, %c0_9] : memref<32x128xf32, #tpu.memory_space<vmem>>, vector<32x128xf32>
      %20 = math.log %19 : vector<32x128xf32>
      %c0_10 = arith.constant 0 : index
      %c0_11 = arith.constant 0 : index
      %21 = vector.load %arg4[%c0_10, %c0_11] : memref<32x128xf32, #tpu.memory_space<vmem>>, vector<32x128xf32>
      %22 = vector.shape_cast %20 : vector<32x128xf32> to vector<1x32x128xf32>
      %cst = arith.constant dense<0.000000e+00> : vector<32x128xf32>
      %23 = vector.multi_reduction <add>, %22, %cst [0] : vector<1x32x128xf32> to vector<32x128xf32>
      %24 = arith.addf %21, %23 : vector<32x128xf32>
      %c0_12 = arith.constant 0 : index
      %c0_13 = arith.constant 0 : index
      %25 = vector.load %arg4[%c0_12, %c0_13] : memref<32x128xf32, #tpu.memory_space<vmem>>, vector<32x128xf32>
      tpu.vector_store %arg4[%c0_12, %c0_13], %24 {strides = array<i32>} : memref<32x128xf32, #tpu.memory_space<vmem>>, vector<32x128xf32>,
    } else {
    }
    %c16_i32_3 = arith.constant 16 : i32
    %10 = arith.cmpi slt, %2, %c16_i32_3 : i32
    %c32_i32_4 = arith.constant 32 : i32
    %11 = arith.addi %2, %c32_i32_4 : i32
    %c16_i32_5 = arith.constant 16 : i32
    %12 = arith.cmpi sgt, %11, %c16_i32_5 : i32
    %13 = arith.andi %10, %12 : i1
    %14 = arith.extui %13 : i1 to i32
    %c0_i32_6 = arith.constant 0 : i32
    %15 = arith.cmpi ne, %14, %c0_i32_6 : i32
    scf.if %15 {
      %19 = tpu.iota {dimensions = array<i32: 0>} : vector<32x128xi32>
      %20 = vector.broadcast %2 : i32 to vector<32x128xi32>
      %21 = arith.addi %20, %19 : vector<32x128xi32>
      %c16_i32_9 = arith.constant 16 : i32
      %22 = vector.broadcast %c16_i32_9 : i32 to vector<32x128xi32>
      %23 = arith.cmpi slt, %21, %22 : vector<32x128xi32>
      %c0 = arith.constant 0 : index
      %c0_10 = arith.constant 0 : index
      %24 = vector.load %arg2[%c0, %c0_10] : memref<32x128xf32, #tpu.memory_space<vmem>>, vector<32x128xf32>
      %cst = arith.constant 1.000000e+00 : f32
      %25 = vector.broadcast %cst : f32 to vector<32x128xf32>
      %26 = arith.select %23, %24, %25 : vector<32x128xi1>, vector<32x128xf32>
      %27 = math.log %26 : vector<32x128xf32>
      %c0_11 = arith.constant 0 : index
      %c0_12 = arith.constant 0 : index
      %28 = vector.load %arg4[%c0_11, %c0_12] : memref<32x128xf32, #tpu.memory_space<vmem>>, vector<32x128xf32>
      %29 = vector.shape_cast %27 : vector<32x128xf32> to vector<1x32x128xf32>
      %cst_13 = arith.constant dense<0.000000e+00> : vector<32x128xf32>
      %30 = vector.multi_reduction <add>, %29, %cst_13 [0] : vector<1x32x128xf32> to vector<32x128xf32>
      %31 = arith.addf %28, %30 : vector<32x128xf32>
      %c0_14 = arith.constant 0 : index
      %c0_15 = arith.constant 0 : index
      %32 = vector.load %arg4[%c0_14, %c0_15] : memref<32x128xf32, #tpu.memory_space<vmem>>, vector<32x128xf32>
      tpu.vector_store %arg4[%c0_14, %c0_15], %31 {strides = array<i32>} : memref<32x128xf32, #tpu.memory_space<vmem>>, vector<32x128xf32>,
    } else {
    }
    %c0_i32_7 = arith.constant 0 : i32
    %16 = arith.cmpi eq, %arg1, %c0_i32_7 : i32
    %17 = arith.extui %16 : i1 to i32
    %c0_i32_8 = arith.constant 0 : i32
    %18 = arith.cmpi ne, %17, %c0_i32_8 : i32
    scf.if %18 {
      %c0 = arith.constant 0 : index
      %c0_9 = arith.constant 0 : index
      %19 = vector.load %arg4[%c0, %c0_9] : memref<32x128xf32, #tpu.memory_space<vmem>>, vector<32x128xf32>
      %20 = vector.shape_cast %19 : vector<32x128xf32> to vector<1x32x128xf32>
      %cst = arith.constant dense<0.000000e+00> : vector<1xf32>
      %21 = vector.multi_reduction <add>, %20, %cst [1, 2] : vector<1x32x128xf32> to vector<1xf32>
      %22 = vector.shape_cast %21 : vector<1xf32> to vector<1x1x1xf32>
      %23 = vector.extract %22[0, 0, 0] : f32 from vector<1x1x1xf32>
      %c0_10 = arith.constant 0 : index
      %c0_11 = arith.constant 0 : index
      %24 = memref.load %arg3[%c0_10, %c0_11] : memref<1x1xf32, #tpu.memory_space<smem>>
      memref.store %23, %arg3[%c0_10, %c0_11] : memref<1x1xf32, #tpu.memory_space<smem>>
    } else {
    }
    return
  }
  func.func @transform_0(%arg0: i32, %arg1: i32) -> (i32, i32) {
    %c1_i32 = arith.constant 1 : i32
    %0 = arith.muli %arg0, %c1_i32 : i32
    %1 = arith.addi %0, %arg1 : i32
    %c0_i32 = arith.constant 0 : i32
    %2 = arith.minsi %1, %c0_i32 : i32
    %c0_i32_0 = arith.constant 0 : i32
    %c0_i32_1 = arith.constant 0 : i32
    return %2, %c0_i32_0 : i32, i32
  }
  func.func @transform_1(%arg0: i32, %arg1: i32) -> (i32, i32) {
    %c0_i32 = arith.constant 0 : i32
    %c0_i32_0 = arith.constant 0 : i32
    return %arg0, %c0_i32 : i32, i32
  }
}

</mosaic_0001>

<llo_original>
// kernel: tpu_custom_call.1
$region0: #{tpu_custom_call.1}
  #allocation0 [shape = 'u32[]', space=smem, size = 0x4, offset = 0x4, fixed_abs, tag = 'smem constant byte address 0x4 - core index']
  #allocation1 [shape = 'u32[144,128]{1,0:T(1,128)}', space=vmem, size = 0x12000, scoped, tag = 'internal scratch']
  #allocation2 [shape = 'f32[32,128]{1,0:T(8,128)}', space=vmem, size = 0x4000, scoped, tag = 'scratch operand']
  %s0 = inlined_call_operand.hbm [shape: f32[16,128], index: 0, kind: input, shape index: {}]
  %s1 = inlined_call_operand.hbm [shape: f32[1,1], index: 1, kind: output, shape index: {}]
  %s2 = sld [smem:[#allocation0]]
  $region34: #{tpu_custom_call.1} parent=0
    _
  %s4 = ssub.s32 1, %s2
  %s5 = scalar_select 0, %s4, %s2
  $region1: #{tpu_custom_call.1} parent=0
    #allocation3 [shape = 'u8[16384]{0}', space=vmem, size = 0x4000, scoped, tag = 'input window, operand 0, single buffered']
    #allocation4 [shape = 's32[1]{0}', space=sflag, size = 0x4, scoped, tag = 'scoped memory for tpu_custom_call.1']
    #allocation5 [shape = 's32[1]{0}', space=sflag, size = 0x4, scoped, tag = 'scoped memory for tpu_custom_call.1']
    #allocation6 [shape = 'u8[512]{0}', space=smem, size = 0x200, scoped, tag = 'output window, operand 0, single buffered']
    %6 = vsyncpa [#allocation4], 0
    %7 = vsyncpa [#allocation5], 0
    // Predicated region
    $region2: #{tpu_custom_call.1} parent=1 // pred_check
      _
    $region3: #{tpu_custom_call.1} parent=1 // pred_check_branch
      %9 = sbr.rel (0) target = $region5
    $region4: #{tpu_custom_call.1} parent=1 // pred_region
      %s10 = sadd.s32 0, 0
      %p11 = scmp.lt.s32.totalorder %s10, 0
      %s12 = scalar_select %p11, %s10, 0
      %s13 = smul.u32 4, %s12
      %s14 = ssub.s32 2, %s13
      %s15 = smul.u32 128, %s14
      %s17 = ssub.s32 512, %s15
      %18 = vsyncadd [#allocation4], %s17
      %p19 = scmp.ne.s32.totalorder 0, %s15
      %s20 = smul.addr %s13, 128
      %s21 = scalar_lea.hbm %s0, %s20
      %s22 = smul.u32 8, %s14
      %s23 = sshll.u32 [#allocation3], 4
      %s24 = int_to_ptr.vmem [resolvable:$true] %s23
      %s25 = sshll.u32 %s22, 4
      %29 = dma.hbm_to_vmem [thread:$0]  (%p19), %s21, %s25, %s24, [#allocation4], 128, 128, 8
    $region5: #{tpu_custom_call.1} parent=1 // pred_fallthru
      _
    // Predicated region
    $region6: #{tpu_custom_call.1} parent=1 // pred_check
      _
    $region7: #{tpu_custom_call.1} parent=1 // pred_check_branch
      %31 = sbr.rel (0) target = $region9
    $region8: #{tpu_custom_call.1} parent=1 // pred_region
      %32 = dma.done [#allocation4], 512
    $region9: #{tpu_custom_call.1} parent=1 // pred_fallthru
      _
    %s33 = sadd.s32 0, 0
    %p34 = scmp.lt.s32.totalorder %s33, 0
    %s35 = scalar_select %p34, %s33, 0
    %s36 = smul.u32 4, %s35
    %s37 = ssub.s32 2, %s36
    %s38 = smul.u32 128, %s37
    %s39 = sadd.s32 0, 0
    %s40 = smul.u32 %s39, 32
    %p41 = scmp.eq.s32.totalorder 0, 0
    // Predicated region
    $region10: #{tpu_custom_call.1} parent=1 // pred_check
      %p42 = pneg %p41
    $region11: #{tpu_custom_call.1} parent=1 // pred_check_branch
      %44 = sbr.rel (%p42) target = $region13
    $region12: #{tpu_custom_call.1} parent=1 // pred_region
      %45 = vst [vmem:[#allocation2] sm:$0xff] 0.0
      %46 = vst [vmem:[#allocation2 + $0x8] sm:$0xff] 0.0
      %47 = vst [vmem:[#allocation2 + $0x10] sm:$0xff] 0.0
      %48 = vst [vmem:[#allocation2 + $0x18] sm:$0xff] 0.0
    $region13: #{tpu_custom_call.1} parent=1 // pred_fallthru
      _
    %s49 = sadd.s32 %s40, 32
    %p50 = scmp.le.s32.totalorder %s49, 16
    // Predicated region
    $region14: #{tpu_custom_call.1} parent=1 // pred_check
      %p51 = pneg %p50
    $region15: #{tpu_custom_call.1} parent=1 // pred_check_branch
      %53 = sbr.rel (%p51) target = $region17
    $region16: #{tpu_custom_call.1} parent=1 // pred_region
      %v54 = vld [vmem:[#allocation3] sm:$0xff]
      %v55 = vld [vmem:[#allocation3 + $0x8] sm:$0xff]
      %v56 = vld [vmem:[#allocation3 + $0x10] sm:$0xff]
      %v57 = vld [vmem:[#allocation3 + $0x18] sm:$0xff]
      %v58 = vlog2.pop %v54
      %v59 = vmul.f32 %v58, 0.6931472
      %v60 = vlog2.pop %v55
      %v61 = vmul.f32 %v60, 0.6931472
      %v62 = vlog2.pop %v56
      %v63 = vmul.f32 %v62, 0.6931472
      %v64 = vlog2.pop %v57
      %v65 = vmul.f32 %v64, 0.6931472
      %v66 = vld [vmem:[#allocation2] sm:$0xff]
      %v67 = vld [vmem:[#allocation2 + $0x8] sm:$0xff]
      %v68 = vld [vmem:[#allocation2 + $0x10] sm:$0xff]
      %v69 = vld [vmem:[#allocation2 + $0x18] sm:$0xff]
      %v70 = vadd.f32 %v59, 0.0
      %v71 = vadd.f32 %v61, 0.0
      %v72 = vadd.f32 %v63, 0.0
      %v73 = vadd.f32 %v65, 0.0
      %v74 = vadd.f32 %v66, %v70
      %v75 = vadd.f32 %v67, %v71
      %v76 = vadd.f32 %v68, %v72
      %v77 = vadd.f32 %v69, %v73
      %78 = vst [vmem:[#allocation2] sm:$0xff] %v74
      %79 = vst [vmem:[#allocation2 + $0x8] sm:$0xff] %v75
      %80 = vst [vmem:[#allocation2 + $0x10] sm:$0xff] %v76
      %81 = vst [vmem:[#allocation2 + $0x18] sm:$0xff] %v77
    $region17: #{tpu_custom_call.1} parent=1 // pred_fallthru
      _
    %p82 = scmp.lt.s32.totalorder %s40, 16
    %p83 = scmp.gt.s32.totalorder %s49, 16
    %p84 = pnand %p82, %p83
    %p85 = pneg %p84
    // Predicated region
    $region18: #{tpu_custom_call.1} parent=1 // pred_check
      _
    $region19: #{tpu_custom_call.1} parent=1 // pred_check_branch
      %87 = sbr.rel (%p84) target = $region21
    $region20: #{tpu_custom_call.1} parent=1 // pred_region
      %v88 = vlaneseq
      %v89 = vshrl.u32 %v88, 7
      %v90 = vadd.s32 %v89, 8
      %v91 = vadd.s32 %v89, 16
      %v92 = vadd.s32 %v89, 24
      %v93 = vstv %s40
      %v94 = vadd.s32 %v93, %v89
      %v95 = vadd.s32 %v93, %v90
      %v96 = vadd.s32 %v93, %v91
      %v97 = vadd.s32 %v93, %v92
      %vm98 = vcmp.lt.s32.totalorder %v94, 16
      %vm99 = vcmp.lt.s32.totalorder %v95, 16
      %vm100 = vcmp.lt.s32.totalorder %v96, 16
      %vm101 = vcmp.lt.s32.totalorder %v97, 16
      %v102 = vld [vmem:[#allocation3] sm:$0xff]
      %v103 = vld [vmem:[#allocation3 + $0x8] sm:$0xff]
      %v104 = vld [vmem:[#allocation3 + $0x10] sm:$0xff]
      %v105 = vld [vmem:[#allocation3 + $0x18] sm:$0xff]
      %v106 = vsel %vm98, %v102, 1.0
      %v107 = vsel %vm99, %v103, 1.0
      %v108 = vsel %vm100, %v104, 1.0
      %v109 = vsel %vm101, %v105, 1.0
      %v110 = vlog2.pop %v106
      %v111 = vmul.f32 %v110, 0.6931472
      %v112 = vlog2.pop %v107
      %v113 = vmul.f32 %v112, 0.6931472
      %v114 = vlog2.pop %v108
      %v115 = vmul.f32 %v114, 0.6931472
      %v116 = vlog2.pop %v109
      %v117 = vmul.f32 %v116, 0.6931472
      %v118 = vld [vmem:[#allocation2] sm:$0xff]
      %v119 = vld [vmem:[#allocation2 + $0x8] sm:$0xff]
      %v120 = vld [vmem:[#allocation2 + $0x10] sm:$0xff]
      %v121 = vld [vmem:[#allocation2 + $0x18] sm:$0xff]
      %v122 = vadd.f32 %v111, 0.0
      %v123 = vadd.f32 %v113, 0.0
      %v124 = vadd.f32 %v115, 0.0
      %v125 = vadd.f32 %v117, 0.0
      %v126 = vadd.f32 %v118, %v122
      %v127 = vadd.f32 %v119, %v123
      %v128 = vadd.f32 %v120, %v124
      %v129 = vadd.f32 %v121, %v125
      %130 = vst [vmem:[#allocation2] sm:$0xff] %v126
      %131 = vst [vmem:[#allocation2 + $0x8] sm:$0xff] %v127
      %132 = vst [vmem:[#allocation2 + $0x10] sm:$0xff] %v128
      %133 = vst [vmem:[#allocation2 + $0x18] sm:$0xff] %v129
    $region21: #{tpu_custom_call.1} parent=1 // pred_fallthru
      _
    // Predicated region
    $region22: #{tpu_custom_call.1} parent=1 // pred_check
      %p134 = pneg %p41
    $region23: #{tpu_custom_call.1} parent=1 // pred_check_branch
      %136 = sbr.rel (%p134) target = $region25
    $region24: #{tpu_custom_call.1} parent=1 // pred_region
      %v137 = vld [vmem:[#allocation2] sm:$0xff]
      %v138 = vld [vmem:[#allocation2 + $0x8] sm:$0xff]
      %v139 = vld [vmem:[#allocation2 + $0x10] sm:$0xff]
      %v140 = vld [vmem:[#allocation2 + $0x18] sm:$0xff]
      %v141 = vadd.f32 %v137, %v138
      %v142 = vadd.f32 %v141, %v139
      %v143 = vadd.f32 %v142, %v140
      %144 = vadd.xlane.f32.xlu0 %v143
      %v145 = vpop.xlane.xlu0 %144
      %v146 = vrot.slane %v145, 4
      %v147 = vadd.f32 %v145, %v146
      %v148 = vrot.slane %v147, 2
      %v149 = vadd.f32 %v147, %v148
      %v150 = vrot.slane %v149, 1
      %v151 = vadd.f32 %v149, %v150
      %s152 = vtos %v151
      %s153 = scalar_lea.smem [#allocation6], 0
      %154 = sst [smem:[%s153]] %s152
    $region25: #{tpu_custom_call.1} parent=1 // pred_fallthru
      _
    // Predicated region
    $region26: #{tpu_custom_call.1} parent=1 // pred_check
      _
    $region27: #{tpu_custom_call.1} parent=1 // pred_check_branch
      %156 = sbr.rel (0) target = $region29
    $region28: #{tpu_custom_call.1} parent=1 // pred_region
      %s158 = ssub.s32 16, 16
      %159 = vsyncadd [#allocation5], %s158
      %162 = dma.smem_to_hbm [#allocation6], 16, %s1, [#allocation5]
    $region29: #{tpu_custom_call.1} parent=1 // pred_fallthru
      _
    // Predicated region
    $region30: #{tpu_custom_call.1} parent=1 // pred_check
      _
    $region31: #{tpu_custom_call.1} parent=1 // pred_check_branch
      %164 = sbr.rel (0) target = $region33
    $region32: #{tpu_custom_call.1} parent=1 // pred_region
      %165 = dma.done [#allocation5], 16
    $region33: #{tpu_custom_call.1} parent=1 // pred_fallthru
      _
    %166 = sfence
    %167 = vsyncpa [#allocation4], 1
    %168 = vsyncpa [#allocation5], 1

</llo_original>
